<compile_context>
chip_gen: v7x
topology: tpu7x:2x2x1
jax: 0.10.0
libtpu: 0.0.40
codegen_flags: <defaults>
</compile_context>

<pallas_src>
import functools

import jax
import jax.numpy as jnp
from jax.experimental import pallas as pl
from jax.experimental.pallas import tpu as pltpu


def wd_kernel(x_ref, wide_ref, w1_ref, b1_ref, w2_ref, b2_ref, w3_ref,
              out_ref, *, apply_sigmoid):
    """Fused Wide&Deep forward for one batch tile (rows on sublanes, x.W layout).

    x_ref    : (TB, FE)  bf16   gathered embeddings for this batch tile
    wide_ref : (TB, 1)   f32    wide-path sum + lin_bias + final-layer bias
    w1_ref   : (FE, d1)  bf16   BN-folded layer-1 weight
    b1_ref   : (1, d1)   f32    BN-folded layer-1 bias
    w2_ref   : (d1, d2)  bf16   BN-folded layer-2 weight
    b2_ref   : (1, d2)   f32    BN-folded layer-2 bias
    w3_ref   : (1, d2)   f32    output-layer weight (applied as a VPU/XLU reduce)
    out_ref  : (TB, 1)   f32    per-row result
    """
    # deep path: MXU matmuls with f32 accumulation; bias/ReLU on the VPU in f32
    h = jnp.dot(x_ref[...], w1_ref[...],
                preferred_element_type=jnp.float32) + b1_ref[...]        # (TB, d1)
    h = jnp.maximum(h, 0.0)
    # TODO(synk): dropout is a no-op in eval mode; train-mode dropout / BN batch
    # statistics are not implemented.
    h = jnp.dot(h.astype(jnp.bfloat16), w2_ref[...],
                preferred_element_type=jnp.float32) + b2_ref[...]        # (TB, d2)
    h = jnp.maximum(h, 0.0)
    # final (d2 -> 1) projection as broadcast-multiply + cross-lane reduce
    # instead of a degenerate N=1 MXU matmul.
    deep = jnp.sum(h * w3_ref[...], axis=-1, keepdims=True)              # (TB, 1)

    z = wide_ref[...] + deep
    if apply_sigmoid:
        z = jax.nn.sigmoid(z)
    out_ref[...] = z


def prepare_inference_params(params):
    """One-time (load-time) prep: fold eval-mode BN into the Linear weights,
    cast matmul operands to bf16, fold all scalar biases into one value."""
    eps = 1e-5
    s1 = params["bn1_gamma"] / jnp.sqrt(params["bn1_var"] + eps)
    w1 = (params["w1"] * s1[None, :]).astype(jnp.bfloat16)                # (FE, d1)
    b1 = (params["b1"] * s1 + params["bn1_beta"]
          - params["bn1_mean"] * s1).reshape(1, -1).astype(jnp.float32)   # (1, d1)
    s2 = params["bn2_gamma"] / jnp.sqrt(params["bn2_var"] + eps)
    w2 = (params["w2"] * s2[None, :]).astype(jnp.bfloat16)                # (d1, d2)
    b2 = (params["b2"] * s2 + params["bn2_beta"]
          - params["bn2_mean"] * s2).reshape(1, -1).astype(jnp.float32)   # (1, d2)
    return {
        "offsets": params["offsets"],
        # bf16 table in HBM: the gather emits bf16 directly (halves table /
        # intermediate / kernel-read bytes of the dominant tensor).
        # TODO(synk): on v7x the first-layer operands could be fp8 for a
        # further bandwidth cut (MXU fp8-native there).
        "emb_table": params["emb_table"].astype(jnp.bfloat16),
        "lin_table": params["lin_table"],                                 # keep f32 (tiny)
        "bias_scalar": (params["lin_bias"][0] + params["b3"][0]).astype(jnp.float32),
        "w1": w1, "b1": b1, "w2": w2, "b2": b2,
        "w3": params["w3"].reshape(1, -1).astype(jnp.float32),            # (1, d2)
    }


def wide_and_deep_forward(x_idx, prep, sigmoid_output=True, block_b=1024):
    """x_idx: int32 (B, F) categorical indices (per-field, un-offset).
    `prep` is the output of prepare_inference_params()."""
    idx = x_idx + prep["offsets"][None, :]            # (B, F) global vocab ids
    B, F = idx.shape
    E = prep["emb_table"].shape[1]
    FE = F * E

    # --- glue: embedding gathers (plain JAX), bf16 out, no transpose ---
    # TODO(synk): for production vocab sizes, move this gather in-kernel via
    # PrefetchScalarGridSpec(num_scalar_prefetch=1) + manual row DMAs (double-
    # buffered VMEM scratch) so tile i+1's gather overlaps tile i's MLP; at
    # small E the per-row DMAs are too small to beat the fused XLA gather.
    x_bf16 = jnp.take(prep["emb_table"], idx, axis=0).reshape(B, FE)      # (B, FE) bf16
    wide = (jnp.sum(jnp.take(prep["lin_table"], idx, axis=0)[..., 0], axis=1)
            + prep["bias_scalar"]).astype(jnp.float32)                    # (B,)

    # --- batch tiling: multiples of 128, clamped to the padded batch ---
    TB = max(128, (min(block_b, 128 * pl.cdiv(B, 128)) // 128) * 128)
    B_pad = TB * pl.cdiv(B, TB)
    pad = B_pad - B
    x_p = jnp.pad(x_bf16, ((0, pad), (0, 0)))                             # (B_pad, FE)
    wide_p = jnp.pad(wide, (0, pad)).reshape(B_pad, 1)                    # (B_pad, 1)

    w1, b1, w2, b2, w3 = prep["w1"], prep["b1"], prep["w2"], prep["b2"], prep["w3"]
    d1, d2 = w1.shape[1], w2.shape[1]

    # VMEM budget: double-buffered activation/wide/out tiles + resident weights,
    # with headroom; stays under v7x's 64 MiB physical VMEM, above v5e's 16 MiB
    # default scoped limit.
    tile_bytes = TB * FE * 2 + TB * 4 * 2
    weight_bytes = (FE * d1 + d1 * d2) * 2 + (d1 + 2 * d2) * 4
    vmem_limit = int(min(64 * 1024 * 1024,
                         max(32 * 1024 * 1024,
                             4 * tile_bytes + 2 * weight_bytes + 2 * 1024 * 1024)))

    grid = (B_pad // TB,)
    batched = lambda i: (i, 0)    # activations / wide / output stream by batch tile
    resident = lambda i: (0, 0)   # weights / biases stay VMEM-resident across steps

    out = pl.pallas_call(
        functools.partial(wd_kernel, apply_sigmoid=sigmoid_output),
        out_shape=jax.ShapeDtypeStruct((B_pad, 1), jnp.float32),
        grid=grid,
        in_specs=[
            pl.BlockSpec((TB, FE), batched),       # embeddings (bf16)
            pl.BlockSpec((TB, 1), batched),        # wide sum + folded scalar biases
            pl.BlockSpec(w1.shape, resident),
            pl.BlockSpec(b1.shape, resident),
            pl.BlockSpec(w2.shape, resident),
            pl.BlockSpec(b2.shape, resident),
            pl.BlockSpec(w3.shape, resident),
        ],
        out_specs=pl.BlockSpec((TB, 1), batched),
        compiler_params=pltpu.CompilerParams(
            dimension_semantics=("parallel",),     # shard batch tiles across TCs
            vmem_limit_bytes=vmem_limit),
    )(x_p, wide_p, w1, b1, w2, b2, w3)

    res = out[:B, 0]
    if sigmoid_output:
        return res                 # matches torch.sigmoid(x.squeeze(1)) -> (B,)
    return res.reshape(B, 1)       # matches raw (B, 1) logits


def make_params(key, field_dims, embed_dim, mlp_dims):
    vocab = int(sum(field_dims))
    F = len(field_dims)
    in_dim = F * embed_dim
    d1, d2 = mlp_dims
    ks = jax.random.split(key, 18)

    def u(k, shape, scale=0.1):
        return (jax.random.uniform(k, shape, jnp.float32) - 0.5) * 2.0 * scale

    offsets = jnp.asarray(
        [0] + list(jnp.cumsum(jnp.asarray(field_dims[:-1])).tolist()), jnp.int32)

    return {
        "offsets": offsets,
        "emb_table": u(ks[0], (vocab, embed_dim), 0.5),
        "lin_table": u(ks[1], (vocab, 1), 0.5),
        "lin_bias": u(ks[2], (1,), 0.5),
        "w1": u(ks[3], (in_dim, d1), 0.3), "b1": u(ks[4], (d1,), 0.3),
        "bn1_gamma": 1.0 + u(ks[5], (d1,), 0.1), "bn1_beta": u(ks[6], (d1,), 0.1),
        "bn1_mean": u(ks[7], (d1,), 0.1), "bn1_var": 1.0 + jnp.abs(u(ks[8], (d1,), 0.1)),
        "w2": u(ks[9], (d1, d2), 0.3), "b2": u(ks[10], (d2,), 0.3),
        "bn2_gamma": 1.0 + u(ks[11], (d2,), 0.1), "bn2_beta": u(ks[12], (d2,), 0.1),
        "bn2_mean": u(ks[13], (d2,), 0.1), "bn2_var": 1.0 + jnp.abs(u(ks[14], (d2,), 0.1)),
        "w3": u(ks[15], (d2, 1), 0.3), "b3": u(ks[16], (1,), 0.3),
    }


def reference_forward_f32(x_idx, params):
    """Pure-f32 JAX reference mirroring the PyTorch eval-mode forward exactly."""
    eps = 1e-5
    idx = x_idx + params["offsets"][None, :]
    B, F = idx.shape
    E = params["emb_table"].shape[1]
    embed = jnp.take(params["emb_table"], idx, axis=0).reshape(B, F * E)
    wide = jnp.sum(jnp.take(params["lin_table"], idx, axis=0)[..., 0],
                   axis=1, keepdims=True) + params["lin_bias"]
    h = embed @ params["w1"] + params["b1"]
    h = (params["bn1_gamma"] * (h - params["bn1_mean"])
         / jnp.sqrt(params["bn1_var"] + eps) + params["bn1_beta"])
    h = jnp.maximum(h, 0.0)
    h = h @ params["w2"] + params["b2"]
    h = (params["bn2_gamma"] * (h - params["bn2_mean"])
         / jnp.sqrt(params["bn2_var"] + eps) + params["bn2_beta"])
    h = jnp.maximum(h, 0.0)
    deep = h @ params["w3"] + params["b3"]
    return jax.nn.sigmoid((wide + deep)[:, 0])


def reference_forward_bf16(x_idx, params):
    """Reference mirroring the kernel's precision: bf16 embedding table, BN
    folded into the weights, bf16 matmul operands, f32 accumulation."""
    eps = 1e-5
    idx = x_idx + params["offsets"][None, :]
    B, F = idx.shape
    E = params["emb_table"].shape[1]
    embed = jnp.take(params["emb_table"].astype(jnp.bfloat16),
                     idx, axis=0).reshape(B, F * E)
    wide = (jnp.sum(jnp.take(params["lin_table"], idx, axis=0)[..., 0], axis=1)
            + params["lin_bias"][0] + params["b3"][0])
    s1 = params["bn1_gamma"] / jnp.sqrt(params["bn1_var"] + eps)
    w1 = (params["w1"] * s1[None, :]).astype(jnp.bfloat16)
    b1 = params["b1"] * s1 + params["bn1_beta"] - params["bn1_mean"] * s1
    s2 = params["bn2_gamma"] / jnp.sqrt(params["bn2_var"] + eps)
    w2 = (params["w2"] * s2[None, :]).astype(jnp.bfloat16)
    b2 = params["b2"] * s2 + params["bn2_beta"] - params["bn2_mean"] * s2
    h = jnp.dot(embed, w1, preferred_element_type=jnp.float32) + b1
    h = jnp.maximum(h, 0.0)
    h = jnp.dot(h.astype(jnp.bfloat16), w2,
                preferred_element_type=jnp.float32) + b2
    h = jnp.maximum(h, 0.0)
    deep = jnp.sum(h * params["w3"][:, 0][None, :], axis=1)
    return jax.nn.sigmoid(wide + deep)


if __name__ == "__main__":
    field_dims = (3, 4, 5, 4)     # num_fields F = 4, vocab = 16
    embed_dim = 8                 # embed_output_dim = 32
    mlp_dims = (32, 16)           # small demo sizes (use multiples of 128 in prod)
    batch = 300                   # exercises batch tiling + padding

    key = jax.random.PRNGKey(0)
    kp, kx = jax.random.split(key)
    params = make_params(kp, field_dims, embed_dim, mlp_dims)
    prep = prepare_inference_params(params)   # one-time weight prep / BN fold

    # per-field indices in [0, field_dims[i])
    maxes = jnp.asarray(field_dims, jnp.int32)[None, :]
    x = (jax.random.randint(kx, (batch, len(field_dims)), 0, 10_000, jnp.int32)
         % maxes).astype(jnp.int32)

    # small block_b here so the demo exercises multi-tile grid + padding
    out = wide_and_deep_forward(x, prep, sigmoid_output=True, block_b=128)
    out = jax.block_until_ready(out)
    assert out.shape == (batch,)

    # precision-matched reference (bf16 table/operands, f32 accumulation)
    ref_bf16 = reference_forward_bf16(x, params)
    assert jnp.allclose(out, ref_bf16, atol=1e-4, rtol=1e-4), (out, ref_bf16)

    # pure-f32 reference of the original module (loose tol due to bf16 operands)
    ref_f32 = reference_forward_f32(x, params)
    assert jnp.allclose(out, ref_f32, atol=5e-2, rtol=5e-2), (out, ref_f32)

    # default (large) tile path gives the same result
    out_big = jax.block_until_ready(wide_and_deep_forward(x, prep, sigmoid_output=True))
    assert jnp.allclose(out, out_big, atol=1e-6, rtol=1e-6)

    # no-sigmoid path returns raw (B, 1) logits like the PyTorch module
    logits = jax.block_until_ready(
        wide_and_deep_forward(x, prep, sigmoid_output=False, block_b=128))
    assert logits.shape == (batch, 1)
    assert jnp.allclose(jax.nn.sigmoid(logits[:, 0]), out, atol=1e-4, rtol=1e-4)

    print("KERNEL_OK")
</pallas_src>

<mosaic_0001>
module attributes {stable_mosaic.version = 11 : i64} {
  func.func @wd_kernel(%arg0: i32, %arg1: memref<128x32xbf16, #tpu.memory_space<vmem>>, %arg2: memref<128x1xf32, #tpu.memory_space<vmem>>, %arg3: memref<32x32xbf16, #tpu.memory_space<vmem>>, %arg4: memref<1x32xf32, #tpu.memory_space<vmem>>, %arg5: memref<32x16xbf16, #tpu.memory_space<vmem>>, %arg6: memref<1x16xf32, #tpu.memory_space<vmem>>, %arg7: memref<1x16xf32, #tpu.memory_space<vmem>>, %arg8: memref<128x1xf32, #tpu.memory_space<vmem>>) attributes {dimension_semantics = [#tpu.dimension_semantics<parallel>], iteration_bounds = array<i64: 3>, scalar_prefetch = 0 : i64, scratch_operands = 0 : i64, tpu.core_type = #tpu.core_type<tc>, window_params = [{transform_indices = @transform_0, window_bounds = array<i64: 128, 32>}, {transform_indices = @transform_1, window_bounds = array<i64: 128, 1>}, {pipeline_mode = #tpu.pipeline_mode<synchronous>, transform_indices = @transform_2, window_bounds = array<i64: 32, 32>}, {pipeline_mode = #tpu.pipeline_mode<synchronous>, transform_indices = @transform_3, window_bounds = array<i64: 1, 32>}, {pipeline_mode = #tpu.pipeline_mode<synchronous>, transform_indices = @transform_4, window_bounds = array<i64: 32, 16>}, {pipeline_mode = #tpu.pipeline_mode<synchronous>, transform_indices = @transform_5, window_bounds = array<i64: 1, 16>}, {pipeline_mode = #tpu.pipeline_mode<synchronous>, transform_indices = @transform_6, window_bounds = array<i64: 1, 16>}, {transform_indices = @transform_7, window_bounds = array<i64: 128, 1>}]} {
    %c0 = arith.constant 0 : index
    %c0_0 = arith.constant 0 : index
    %0 = vector.load %arg1[%c0, %c0_0] : memref<128x32xbf16, #tpu.memory_space<vmem>>, vector<128x32xbf16>
    %c0_1 = arith.constant 0 : index
    %c0_2 = arith.constant 0 : index
    %1 = vector.load %arg3[%c0_1, %c0_2] : memref<32x32xbf16, #tpu.memory_space<vmem>>, vector<32x32xbf16>
    %cst = arith.constant dense<0.000000e+00> : vector<128x32xf32>
    %2 = tpu.matmul %0, %1, %cst {dimension_numbers = #tpu.dot_dimension_numbers<[1], [0], [0], [1], [0, 0, 1, 1], [], []>} : vector<128x32xbf16>, vector<32x32xbf16>, vector<128x32xf32> -> vector<128x32xf32>
    %c0_3 = arith.constant 0 : index
    %c0_4 = arith.constant 0 : index
    %3 = vector.load %arg4[%c0_3, %c0_4] : memref<1x32xf32, #tpu.memory_space<vmem>>, vector<1x32xf32>
    %4 = vector.broadcast %3 : vector<1x32xf32> to vector<128x32xf32>
    %5 = arith.addf %2, %4 : vector<128x32xf32>
    %cst_5 = arith.constant 0.000000e+00 : f32
    %6 = vector.broadcast %cst_5 : f32 to vector<128x32xf32>
    %7 = arith.maximumf %5, %6 : vector<128x32xf32>
    %8 = arith.truncf %7 : vector<128x32xf32> to vector<128x32xbf16>
    %c0_6 = arith.constant 0 : index
    %c0_7 = arith.constant 0 : index
    %9 = vector.load %arg5[%c0_6, %c0_7] : memref<32x16xbf16, #tpu.memory_space<vmem>>, vector<32x16xbf16>
    %cst_8 = arith.constant dense<0.000000e+00> : vector<128x16xf32>
    %10 = tpu.matmul %8, %9, %cst_8 {dimension_numbers = #tpu.dot_dimension_numbers<[1], [0], [0], [1], [0, 0, 1, 1], [], []>} : vector<128x32xbf16>, vector<32x16xbf16>, vector<128x16xf32> -> vector<128x16xf32>
    %c0_9 = arith.constant 0 : index
    %c0_10 = arith.constant 0 : index
    %11 = vector.load %arg6[%c0_9, %c0_10] : memref<1x16xf32, #tpu.memory_space<vmem>>, vector<1x16xf32>
    %12 = vector.broadcast %11 : vector<1x16xf32> to vector<128x16xf32>
    %13 = arith.addf %10, %12 : vector<128x16xf32>
    %cst_11 = arith.constant 0.000000e+00 : f32
    %14 = vector.broadcast %cst_11 : f32 to vector<128x16xf32>
    %15 = arith.maximumf %13, %14 : vector<128x16xf32>
    %c0_12 = arith.constant 0 : index
    %c0_13 = arith.constant 0 : index
    %16 = vector.load %arg7[%c0_12, %c0_13] : memref<1x16xf32, #tpu.memory_space<vmem>>, vector<1x16xf32>
    %17 = vector.broadcast %16 : vector<1x16xf32> to vector<128x16xf32>
    %18 = arith.mulf %15, %17 : vector<128x16xf32>
    %cst_14 = arith.constant dense<0.000000e+00> : vector<128xf32>
    %19 = vector.multi_reduction <add>, %18, %cst_14 [1] : vector<128x16xf32> to vector<128xf32>
    %20 = vector.shape_cast %19 : vector<128xf32> to vector<128x1xf32>
    %c0_15 = arith.constant 0 : index
    %c0_16 = arith.constant 0 : index
    %21 = vector.load %arg2[%c0_15, %c0_16] : memref<128x1xf32, #tpu.memory_space<vmem>>, vector<128x1xf32>
    %22 = arith.addf %21, %20 : vector<128x1xf32>
    %23 = arith.negf %22 : vector<128x1xf32>
    %24 = math.exp %23 : vector<128x1xf32>
    %cst_17 = arith.constant 1.000000e+00 : f32
    %25 = vector.broadcast %cst_17 : f32 to vector<128x1xf32>
    %26 = arith.addf %25, %24 : vector<128x1xf32>
    %27 = arith.divf %25, %26 : vector<128x1xf32>
    %c0_18 = arith.constant 0 : index
    %c0_19 = arith.constant 0 : index
    %28 = vector.load %arg8[%c0_18, %c0_19] : memref<128x1xf32, #tpu.memory_space<vmem>>, vector<128x1xf32>
    tpu.vector_store %arg8[%c0_18, %c0_19], %27 {strides = array<i32>} : memref<128x1xf32, #tpu.memory_space<vmem>>, vector<128x1xf32>,
    return
  }
  func.func @transform_0(%arg0: i32) -> (i32, i32) {
    %c0_i32 = arith.constant 0 : i32
    %c0_i32_0 = arith.constant 0 : i32
    return %arg0, %c0_i32 : i32, i32
  }
  func.func @transform_1(%arg0: i32) -> (i32, i32) {
    %c0_i32 = arith.constant 0 : i32
    %c0_i32_0 = arith.constant 0 : i32
    return %arg0, %c0_i32 : i32, i32
  }
  func.func @transform_2(%arg0: i32) -> (i32, i32) {
    %c0_i32 = arith.constant 0 : i32
    %c0_i32_0 = arith.constant 0 : i32
    %c0_i32_1 = arith.constant 0 : i32
    return %c0_i32, %c0_i32_0 : i32, i32
  }
  func.func @transform_3(%arg0: i32) -> (i32, i32) {
    %c0_i32 = arith.constant 0 : i32
    %c0_i32_0 = arith.constant 0 : i32
    %c0_i32_1 = arith.constant 0 : i32
    return %c0_i32, %c0_i32_0 : i32, i32
  }
  func.func @transform_4(%arg0: i32) -> (i32, i32) {
    %c0_i32 = arith.constant 0 : i32
    %c0_i32_0 = arith.constant 0 : i32
    %c0_i32_1 = arith.constant 0 : i32
    return %c0_i32, %c0_i32_0 : i32, i32
  }
  func.func @transform_5(%arg0: i32) -> (i32, i32) {
    %c0_i32 = arith.constant 0 : i32
    %c0_i32_0 = arith.constant 0 : i32
    %c0_i32_1 = arith.constant 0 : i32
    return %c0_i32, %c0_i32_0 : i32, i32
  }
  func.func @transform_6(%arg0: i32) -> (i32, i32) {
    %c0_i32 = arith.constant 0 : i32
    %c0_i32_0 = arith.constant 0 : i32
    %c0_i32_1 = arith.constant 0 : i32
    return %c0_i32, %c0_i32_0 : i32, i32
  }
  func.func @transform_7(%arg0: i32) -> (i32, i32) {
    %c0_i32 = arith.constant 0 : i32
    %c0_i32_0 = arith.constant 0 : i32
    return %arg0, %c0_i32 : i32, i32
  }
}

</mosaic_0001>

<llo_original>
// kernel: tpu_custom_call.1
$region0: #{tpu_custom_call.1}
  #allocation0 [shape = 'u32[]', space=smem, size = 0x4, offset = 0x4, fixed_abs, tag = 'smem constant byte address 0x4 - core index']
  #allocation1 [shape = 'u32[144,128]{1,0:T(1,128)}', space=vmem, size = 0x12000, scoped, tag = 'internal scratch']
  %s0 = inlined_call_operand.vmem [shape: bf16[384,32], index: 0, kind: input, shape index: {}]
  %s1 = inlined_call_operand.vmem [shape: f32[384,1], index: 1, kind: input, shape index: {}]
  %s2 = inlined_call_operand.vmem [shape: bf16[32,32], index: 2, kind: input, shape index: {}]
  %s3 = inlined_call_operand.vmem [shape: f32[1,32], index: 3, kind: input, shape index: {}]
  %s4 = inlined_call_operand.vmem [shape: bf16[32,16], index: 4, kind: input, shape index: {}]
  %s5 = inlined_call_operand.vmem [shape: f32[1,16], index: 5, kind: input, shape index: {}]
  %s6 = inlined_call_operand.vmem [shape: f32[1,16], index: 6, kind: input, shape index: {}]
  %s7 = inlined_call_operand.vmem [shape: f32[384,1], index: 7, kind: output, shape index: {}]
  %s8 = sld [smem:[#allocation0]]
  $region61: #{tpu_custom_call.1} parent=0
    _
  %s10 = ssub.s32 1, %s8
  %s11 = scalar_select 0, %s10, %s8
  loop: start=0, step=1, limit=5
  $region2: #{tpu_custom_call.1} parent=0 // loop_pre_header
    _
  $region3: #{tpu_custom_call.1} parent=0 // loop_header
    %s13 = sphi 0, %s17
    %p14 = scmp.ge.s32.totalorder %s13, 5
    %s23 = sphi 0, %s25
    %s26 = sphi 0, %s23
    %s27 = sphi 0, %s26
    %s43 = sphi 0, %s27
    %s49 = sphi 0, %s51
    %s52 = sphi 0, %s49
    %s53 = sphi 0, %s52
    %s69 = sphi 0, %s53
    %s73 = sphi 0, %s73
    %s75 = sphi 0, %s73
    %s76 = sphi 0, %s75
    %s90 = sphi 0, %s76
    %s94 = sphi 0, %s94
    %s96 = sphi 0, %s94
    %s97 = sphi 0, %s96
    %s111 = sphi 0, %s97
    %s115 = sphi 0, %s115
    %s117 = sphi 0, %s115
    %s118 = sphi 0, %s117
    %s132 = sphi 0, %s118
    %s136 = sphi 0, %s136
    %s138 = sphi 0, %s136
    %s139 = sphi 0, %s138
    %s153 = sphi 0, %s139
    %s157 = sphi 0, %s157
    %s159 = sphi 0, %s157
    %s160 = sphi 0, %s159
    %s174 = sphi 0, %s160
    %s180 = sphi 0, %s182
    %s183 = sphi 0, %s180
    %s184 = sphi 0, %s183
    %s200 = sphi 0, %s184
  $region4: #{tpu_custom_call.1} parent=0 // loop_header_branch
    %16 = sbr.rel (%p14) target = $region8
  $region5: #{tpu_custom_call.1} parent=0 // loop_body
    %s18 = ssub.s32 %s13, 1
    %s19 = ssub.s32 %s13, 2
    %s20 = sadd.s32 %s13, 1
    %s21 = ssub.s32 %s13, %s20
    %p22 = scmp.eq.s32.totalorder %s21, 0
    %s24 = sadd.s32 %s23, 1
    %s25 = scalar_select %p22, %s23, %s24
    %p28 = pneg %p22
    %p29 = scmp.eq.s32.totalorder %s13, 2
    %p30 = por %p28, %p29
    %p31 = scmp.ne.s32.totalorder %s23, %s26
    %p32 = scmp.eq.s32.totalorder %s13, 0
    %p33 = por %p31, %p32
    %p34 = scmp.ne.s32.totalorder %s23, %s26
    %p35 = scmp.eq.s32.totalorder %s18, 2
    %p36 = por %p34, %p35
    %p37 = scmp.ne.s32.totalorder %s26, %s27
    %p38 = scmp.eq.s32.totalorder %s18, 0
    %p39 = por %p37, %p38
    %p40 = scmp.ne.s32.totalorder %s26, %s27
    %p41 = scmp.eq.s32.totalorder %s19, 2
    %p42 = por %p40, %p41
    %p44 = scmp.ne.s32.totalorder %s27, %s43
    %p45 = scmp.eq.s32.totalorder %s19, 0
    %p46 = por %p44, %p45
    %s47 = ssub.s32 %s13, %s20
    %p48 = scmp.eq.s32.totalorder %s47, 0
    %s50 = sadd.s32 %s49, 1
    %s51 = scalar_select %p48, %s49, %s50
    %p54 = pneg %p48
    %p55 = scmp.eq.s32.totalorder %s13, 2
    %p56 = por %p54, %p55
    %p57 = scmp.ne.s32.totalorder %s49, %s52
    %p58 = scmp.eq.s32.totalorder %s13, 0
    %p59 = por %p57, %p58
    %p60 = scmp.ne.s32.totalorder %s49, %s52
    %p61 = scmp.eq.s32.totalorder %s18, 2
    %p62 = por %p60, %p61
    %p63 = scmp.ne.s32.totalorder %s52, %s53
    %p64 = scmp.eq.s32.totalorder %s18, 0
    %p65 = por %p63, %p64
    %p66 = scmp.ne.s32.totalorder %s52, %s53
    %p67 = scmp.eq.s32.totalorder %s19, 2
    %p68 = por %p66, %p67
    %p70 = scmp.ne.s32.totalorder %s53, %s69
    %p71 = scmp.eq.s32.totalorder %s19, 0
    %p72 = por %p70, %p71
    %s74 = sadd.s32 %s73, 1
    %p77 = scmp.eq.s32.totalorder %s13, 2
    %p78 = scmp.ne.s32.totalorder %s73, %s75
    %p79 = scmp.eq.s32.totalorder %s13, 0
    %p80 = por %p78, %p79
    %p81 = scmp.ne.s32.totalorder %s73, %s75
    %p82 = scmp.eq.s32.totalorder %s18, 2
    %p83 = por %p81, %p82
    %p84 = scmp.ne.s32.totalorder %s75, %s76
    %p85 = scmp.eq.s32.totalorder %s18, 0
    %p86 = por %p84, %p85
    %p87 = scmp.ne.s32.totalorder %s75, %s76
    %p88 = scmp.eq.s32.totalorder %s19, 2
    %p89 = por %p87, %p88
    %p91 = scmp.ne.s32.totalorder %s76, %s90
    %p92 = scmp.eq.s32.totalorder %s19, 0
    %p93 = por %p91, %p92
    %s95 = sadd.s32 %s94, 1
    %p98 = scmp.eq.s32.totalorder %s13, 2
    %p99 = scmp.ne.s32.totalorder %s94, %s96
    %p100 = scmp.eq.s32.totalorder %s13, 0
    %p101 = por %p99, %p100
    %p102 = scmp.ne.s32.totalorder %s94, %s96
    %p103 = scmp.eq.s32.totalorder %s18, 2
    %p104 = por %p102, %p103
    %p105 = scmp.ne.s32.totalorder %s96, %s97
    %p106 = scmp.eq.s32.totalorder %s18, 0
    %p107 = por %p105, %p106
    %p108 = scmp.ne.s32.totalorder %s96, %s97
    %p109 = scmp.eq.s32.totalorder %s19, 2
    %p110 = por %p108, %p109
    %p112 = scmp.ne.s32.totalorder %s97, %s111
    %p113 = scmp.eq.s32.totalorder %s19, 0
    %p114 = por %p112, %p113
    %s116 = sadd.s32 %s115, 1
    %p119 = scmp.eq.s32.totalorder %s13, 2
    %p120 = scmp.ne.s32.totalorder %s115, %s117
    %p121 = scmp.eq.s32.totalorder %s13, 0
    %p122 = por %p120, %p121
    %p123 = scmp.ne.s32.totalorder %s115, %s117
    %p124 = scmp.eq.s32.totalorder %s18, 2
    %p125 = por %p123, %p124
    %p126 = scmp.ne.s32.totalorder %s117, %s118
    %p127 = scmp.eq.s32.totalorder %s18, 0
    %p128 = por %p126, %p127
    %p129 = scmp.ne.s32.totalorder %s117, %s118
    %p130 = scmp.eq.s32.totalorder %s19, 2
    %p131 = por %p129, %p130
    %p133 = scmp.ne.s32.totalorder %s118, %s132
    %p134 = scmp.eq.s32.totalorder %s19, 0
    %p135 = por %p133, %p134
    %s137 = sadd.s32 %s136, 1
    %p140 = scmp.eq.s32.totalorder %s13, 2
    %p141 = scmp.ne.s32.totalorder %s136, %s138
    %p142 = scmp.eq.s32.totalorder %s13, 0
    %p143 = por %p141, %p142
    %p144 = scmp.ne.s32.totalorder %s136, %s138
    %p145 = scmp.eq.s32.totalorder %s18, 2
    %p146 = por %p144, %p145
    %p147 = scmp.ne.s32.totalorder %s138, %s139
    %p148 = scmp.eq.s32.totalorder %s18, 0
    %p149 = por %p147, %p148
    %p150 = scmp.ne.s32.totalorder %s138, %s139
    %p151 = scmp.eq.s32.totalorder %s19, 2
    %p152 = por %p150, %p151
    %p154 = scmp.ne.s32.totalorder %s139, %s153
    %p155 = scmp.eq.s32.totalorder %s19, 0
    %p156 = por %p154, %p155
    %s158 = sadd.s32 %s157, 1
    %p161 = scmp.eq.s32.totalorder %s13, 2
    %p162 = scmp.ne.s32.totalorder %s157, %s159
    %p163 = scmp.eq.s32.totalorder %s13, 0
    %p164 = por %p162, %p163
    %p165 = scmp.ne.s32.totalorder %s157, %s159
    %p166 = scmp.eq.s32.totalorder %s18, 2
    %p167 = por %p165, %p166
    %p168 = scmp.ne.s32.totalorder %s159, %s160
    %p169 = scmp.eq.s32.totalorder %s18, 0
    %p170 = por %p168, %p169
    %p171 = scmp.ne.s32.totalorder %s159, %s160
    %p172 = scmp.eq.s32.totalorder %s19, 2
    %p173 = por %p171, %p172
    %p175 = scmp.ne.s32.totalorder %s160, %s174
    %p176 = scmp.eq.s32.totalorder %s19, 0
    %p177 = por %p175, %p176
    %s178 = ssub.s32 %s13, %s20
    %p179 = scmp.eq.s32.totalorder %s178, 0
    %s181 = sadd.s32 %s180, 1
    %s182 = scalar_select %p179, %s180, %s181
    %p185 = pneg %p179
    %p186 = scmp.eq.s32.totalorder %s13, 2
    %p187 = por %p185, %p186
    %p188 = scmp.ne.s32.totalorder %s180, %s183
    %p189 = scmp.eq.s32.totalorder %s13, 0
    %p190 = por %p188, %p189
    %p191 = scmp.ne.s32.totalorder %s180, %s183
    %p192 = scmp.eq.s32.totalorder %s18, 2
    %p193 = por %p191, %p192
    %p194 = scmp.ne.s32.totalorder %s183, %s184
    %p195 = scmp.eq.s32.totalorder %s18, 0
    %p196 = por %p194, %p195
    %p197 = scmp.ne.s32.totalorder %s183, %s184
    %p198 = scmp.eq.s32.totalorder %s19, 2
    %p199 = por %p197, %p198
    %p201 = scmp.ne.s32.totalorder %s184, %s200
    %p202 = scmp.eq.s32.totalorder %s19, 0
    %p203 = por %p201, %p202
    %p204 = scmp.le.s32.totalorder 1, %s13
    %p205 = scmp.lt.s32.totalorder %s13, 4
    %p206 = pnand %p204, %p205
    %p207 = pneg %p206
    // Predicated region
    $region9: #{tpu_custom_call.1} parent=5 // pred_check
      _
    $region10: #{tpu_custom_call.1} parent=5 // pred_check_branch
      %209 = sbr.rel (%p206) target = $region12
    $region11: #{tpu_custom_call.1} parent=5 // pred_region
      %s210 = ssub.s32 %s13, 1
      // Predicated region
      $region13: #{tpu_custom_call.1} parent=11 // pred_check
        %p211 = pneg %p86
      $region14: #{tpu_custom_call.1} parent=11 // pred_check_branch
        %213 = sbr.rel (%p211) target = $region16
      $region15: #{tpu_custom_call.1} parent=11 // pred_region
        _
      $region16: #{tpu_custom_call.1} parent=11 // pred_fallthru
        _
      // Predicated region
      $region17: #{tpu_custom_call.1} parent=11 // pred_check
        %p214 = pneg %p107
      $region18: #{tpu_custom_call.1} parent=11 // pred_check_branch
        %216 = sbr.rel (%p214) target = $region20
      $region19: #{tpu_custom_call.1} parent=11 // pred_region
        _
      $region20: #{tpu_custom_call.1} parent=11 // pred_fallthru
        _
      // Predicated region
      $region21: #{tpu_custom_call.1} parent=11 // pred_check
        %p217 = pneg %p128
      $region22: #{tpu_custom_call.1} parent=11 // pred_check_branch
        %219 = sbr.rel (%p217) target = $region24
      $region23: #{tpu_custom_call.1} parent=11 // pred_region
        _
      $region24: #{tpu_custom_call.1} parent=11 // pred_fallthru
        _
      // Predicated region
      $region25: #{tpu_custom_call.1} parent=11 // pred_check
        %p220 = pneg %p149
      $region26: #{tpu_custom_call.1} parent=11 // pred_check_branch
        %222 = sbr.rel (%p220) target = $region28
      $region27: #{tpu_custom_call.1} parent=11 // pred_region
        _
      $region28: #{tpu_custom_call.1} parent=11 // pred_fallthru
        _
      // Predicated region
      $region29: #{tpu_custom_call.1} parent=11 // pred_check
        %p223 = pneg %p170
      $region30: #{tpu_custom_call.1} parent=11 // pred_check_branch
        %225 = sbr.rel (%p223) target = $region32
      $region31: #{tpu_custom_call.1} parent=11 // pred_region
        _
      $region32: #{tpu_custom_call.1} parent=11 // pred_fallthru
        _
    $region12: #{tpu_custom_call.1} parent=5 // pred_fallthru
      _
    %p226 = scmp.lt.s32.totalorder %s13, 3
    // Predicated region
    $region33: #{tpu_custom_call.1} parent=5 // pred_check
      %p227 = pneg %p226
    $region34: #{tpu_custom_call.1} parent=5 // pred_check_branch
      %229 = sbr.rel (%p227) target = $region36
    $region35: #{tpu_custom_call.1} parent=5 // pred_region
      // Predicated region
      $region37: #{tpu_custom_call.1} parent=35 // pred_check
        %p230 = pneg %p33
      $region38: #{tpu_custom_call.1} parent=35 // pred_check_branch
        %232 = sbr.rel (%p230) target = $region40
      $region39: #{tpu_custom_call.1} parent=35 // pred_region
        %s233 = smul.u32 16, %s13
        %p234 = scmp.lt.s32.totalorder %s233, 47
        %s235 = scalar_select %p234, %s233, 47
        %s236 = smul.addr %s235, 4
        %s237 = scalar_lea.vmem %s0, %s236
        %s238 = smul.u32 16, %s13
      $region40: #{tpu_custom_call.1} parent=35 // pred_fallthru
        _
      // Predicated region
      $region41: #{tpu_custom_call.1} parent=35 // pred_check
        %p239 = pneg %p59
      $region42: #{tpu_custom_call.1} parent=35 // pred_check_branch
        %241 = sbr.rel (%p239) target = $region44
      $region43: #{tpu_custom_call.1} parent=35 // pred_region
        %s242 = smul.u32 16, %s13
        %p243 = scmp.lt.s32.totalorder %s242, 47
        %s244 = scalar_select %p243, %s242, 47
        %s245 = smul.addr %s244, 8
        %s246 = scalar_lea.vmem %s1, %s245
        %s247 = smul.u32 16, %s13
      $region44: #{tpu_custom_call.1} parent=35 // pred_fallthru
        _
    $region36: #{tpu_custom_call.1} parent=5 // pred_fallthru
      _
    %p248 = scmp.le.s32.totalorder 1, %s13
    %p249 = scmp.lt.s32.totalorder %s13, 4
    %p250 = pnand %p248, %p249
    %p251 = pneg %p250
    // Predicated region
    $region45: #{tpu_custom_call.1} parent=5 // pred_check
      _
    $region46: #{tpu_custom_call.1} parent=5 // pred_check_branch
      %253 = sbr.rel (%p250) target = $region48
    $region47: #{tpu_custom_call.1} parent=5 // pred_region
      %s254 = ssub.s32 %s13, 1
      %s255 = smul.u32 16, %s18
      %p256 = scmp.lt.s32.totalorder %s255, 47
      %s257 = scalar_select %p256, %s255, 47
      %s258 = smul.addr %s257, 4
      %s259 = scalar_lea.vmem %s0, %s258
      %p260 = pneg %p39
      %p261 = pneg %p36
      %s262 = smul.u32 16, %s18
      %p263 = scmp.lt.s32.totalorder %s262, 47
      %s264 = scalar_select %p263, %s262, 47
      %s265 = smul.addr %s264, 8
      %s266 = scalar_lea.vmem %s1, %s265
      %p267 = pneg %p65
      %p268 = pneg %p62
      %p269 = pneg %p86
      %p270 = pneg %p83
      %p271 = pneg %p107
      %p272 = pneg %p104
      %p273 = pneg %p128
      %p274 = pneg %p125
      %p275 = pneg %p149
      %p276 = pneg %p146
      %p277 = pneg %p170
      %p278 = pneg %p167
      %p279 = pneg %p196
      %p280 = pneg %p193
      %s281 = smul.u32 16, %s18
      %p282 = scmp.lt.s32.totalorder %s281, 47
      %s283 = scalar_select %p282, %s281, 47
      %s284 = smul.addr %s283, 8
      %s285 = scalar_lea.vmem %s7, %s284
      %s286 = smul.u32 16, %s18
      %p287 = scmp.lt.s32.totalorder %s286, 47
      %s288 = scalar_select %p287, %s286, 47
      %s289 = smul.addr %s288, 4
      %s290 = scalar_lea.vmem %s0, %s289
      %s291 = smul.u32 16, %s18
      %s292 = smul.u32 16, %s18
      %p293 = scmp.lt.s32.totalorder %s292, 47
      %s294 = scalar_select %p293, %s292, 47
      %s295 = smul.addr %s294, 8
      %s296 = scalar_lea.vmem %s1, %s295
      %s297 = smul.u32 16, %s18
      %s298 = smul.u32 16, %s18
      %p299 = scmp.lt.s32.totalorder %s298, 47
      %s300 = scalar_select %p299, %s298, 47
      %s301 = smul.addr %s300, 8
      %s302 = scalar_lea.vmem %s7, %s301
      %s303 = smul.u32 16, %s18
      %v305 = vld [vmem:[%s290] sm:$0xf]
      %v306 = vld [vmem:[%s290 + $0x4] sm:$0xf]
      %v307 = vld [vmem:[%s290 + $0x8] sm:$0xf]
      %v308 = vld [vmem:[%s290 + $0xc] sm:$0xf]
      %v309 = vld [vmem:[%s290 + $0x10] sm:$0xf]
      %v310 = vld [vmem:[%s290 + $0x14] sm:$0xf]
      %v311 = vld [vmem:[%s290 + $0x18] sm:$0xf]
      %v312 = vld [vmem:[%s290 + $0x1c] sm:$0xf]
      %v313 = vld [vmem:[%s290 + $0x20] sm:$0xf]
      %v314 = vld [vmem:[%s290 + $0x24] sm:$0xf]
      %v315 = vld [vmem:[%s290 + $0x28] sm:$0xf]
      %v316 = vld [vmem:[%s290 + $0x2c] sm:$0xf]
      %v317 = vld [vmem:[%s290 + $0x30] sm:$0xf]
      %v318 = vld [vmem:[%s290 + $0x34] sm:$0xf]
      %v319 = vld [vmem:[%s290 + $0x38] sm:$0xf]
      %v320 = vld [vmem:[%s290 + $0x3c] sm:$0xf]
      %v321 = vld [vmem:[%s2] sm:$0xf]
      %v322 = vld [vmem:[%s2 + $0x4] sm:$0xf]
      %v323 = vld [vmem:[%s2 + $0x8] sm:$0xf]
      %v324 = vld [vmem:[%s2 + $0xc] sm:$0xf]
      %v325 = vld [vmem:[%s3] sm:$0x1]
      %v327 = vlaneseq
      %v328 = vshrl.u32 %v327, 7
      %v329 = vsub.s32 0, %v328
      %v330 = vrot.slane %v325, %v329
      %v348 = vunpack.c.l.b16 %v305
      %v349 = vunpack.c.l.b16 %v306
      %v350 = vunpack.c.l.b16 %v307
      %v351 = vunpack.c.l.b16 %v308
      %v352 = vunpack.c.l.b16 %v309
      %v353 = vunpack.c.l.b16 %v310
      %v354 = vunpack.c.l.b16 %v311
      %v355 = vunpack.c.l.b16 %v312
      %v356 = vunpack.c.l.b16 %v313
      %v357 = vunpack.c.l.b16 %v314
      %v358 = vunpack.c.l.b16 %v315
      %v359 = vunpack.c.l.b16 %v316
      %v360 = vunpack.c.l.b16 %v317
      %v361 = vunpack.c.l.b16 %v318
      %v362 = vunpack.c.l.b16 %v319
      %v363 = vunpack.c.l.b16 %v320
      %v364 = vpack.c.b16 %v349, %v348
      %v365 = vpack.c.b16 %v351, %v350
      %v366 = vpack.c.b16 %v353, %v352
      %v367 = vpack.c.b16 %v355, %v354
      %v368 = vpack.c.b16 %v357, %v356
      %v369 = vpack.c.b16 %v359, %v358
      %v370 = vpack.c.b16 %v361, %v360
      %v371 = vpack.c.b16 %v363, %v362
      %v376 = vunpack.c.l.b16 %v321
      %v377 = vunpack.c.l.b16 %v322
      %v378 = vunpack.c.l.b16 %v323
      %v379 = vunpack.c.l.b16 %v324
      %v380 = vpack.c.b16 %v377, %v376
      %v381 = vpack.c.b16 %v379, %v378
      %vm384 = vcmask 261120
      %v386 = vsel %vm384, %v364, 0
      %v389 = vsel %vm384, %v365, 0
      %v392 = vsel %vm384, %v366, 0
      %v395 = vsel %vm384, %v367, 0
      %v398 = vsel %vm384, %v368, 0
      %v401 = vsel %vm384, %v369, 0
      %v404 = vsel %vm384, %v370, 0
      %v407 = vsel %vm384, %v371, 0
      %409 = vmatprep.subr.bf16.mxu0 0
      %410 = vmatpush1.bf16.msra.mxu0 %v380
      %411 = vmatprep.subr.bf16.mxu0 0
      %412 = vmatpush1.bf16.msra.mxu0 %v381
      %413 = vmatprep.subr.bf16.mxu0 0
      %414 = vmatpush1.bf16.msra.mxu0 0
      %415 = vmatprep.subr.bf16.mxu0 0
      %416 = vmatpush1.bf16.msra.mxu0 0
      %417 = vmatprep.subr.bf16.mxu0 0
      %418 = vmatpush1.bf16.msra.mxu0 0
      %419 = vmatprep.subr.bf16.mxu0 0
      %420 = vmatpush1.bf16.msra.mxu0 0
      %421 = vmatprep.subr.bf16.mxu0 0
      %422 = vmatpush1.bf16.msra.mxu0 0
      %423 = vmatprep.subr.bf16.mxu0 0
      %424 = vmatpush1.bf16.msra.mxu0 0
      %425 = vmatprep.subr.bf16.mxu0 0
      %426 = vmatpush1.bf16.msra.mxu0 0
      %427 = vmatprep.subr.bf16.mxu0 0
      %428 = vmatpush1.bf16.msra.mxu0 0
      %429 = vmatprep.subr.bf16.mxu0 0
      %430 = vmatpush1.bf16.msra.mxu0 0
      %431 = vmatprep.subr.bf16.mxu0 0
      %432 = vmatpush1.bf16.msra.mxu0 0
      %433 = vmatprep.subr.bf16.mxu0 0
      %434 = vmatpush1.bf16.msra.mxu0 0
      %435 = vmatprep.subr.bf16.mxu0 0
      %436 = vmatpush1.bf16.msra.mxu0 0
      %437 = vmatprep.subr.bf16.mxu0 0
      %438 = vmatpush1.bf16.msra.mxu0 0
      %439 = vmatprep.subr.bf16.mxu0 0
      %440 = vmatpush1.bf16.msra.mxu0 0
      %441 = vmatprep.mubr.bf16.mxu0 0
      %442 = vmatmul.mubr.bf16.gmra.mrb[0].mxu0 %v386
      %v443 = vpop.f32.mrb[0].mxu0
      %v444 = vadd.f32 %v330, %v443
      %v445 = vpop.f32.mrb[0].mxu0
      %v446 = vpop.f32.mrb[0].mxu0
      %v447 = vadd.f32 %v330, %v446
      %v448 = vpop.f32.mrb[0].mxu0
      %449 = vmatprep.mubr.bf16.mxu0 0
      %450 = vmatmul.mubr.bf16.gmra.mrb[0].mxu0 %v389
      %v451 = vpop.f32.mrb[0].mxu0
      %v452 = vadd.f32 %v330, %v451
      %v453 = vpop.f32.mrb[0].mxu0
      %v454 = vpop.f32.mrb[0].mxu0
      %v455 = vadd.f32 %v330, %v454
      %v456 = vpop.f32.mrb[0].mxu0
      %457 = vmatprep.mubr.bf16.mxu0 0
      %458 = vmatmul.mubr.bf16.gmra.mrb[0].mxu0 %v392
      %v459 = vpop.f32.mrb[0].mxu0
      %v460 = vadd.f32 %v330, %v459
      %v461 = vpop.f32.mrb[0].mxu0
      %v462 = vpop.f32.mrb[0].mxu0
      %v463 = vadd.f32 %v330, %v462
      %v464 = vpop.f32.mrb[0].mxu0
      %465 = vmatprep.mubr.bf16.mxu0 0
      %466 = vmatmul.mubr.bf16.gmra.mrb[0].mxu0 %v395
      %v467 = vpop.f32.mrb[0].mxu0
      %v468 = vadd.f32 %v330, %v467
      %v469 = vpop.f32.mrb[0].mxu0
      %v470 = vpop.f32.mrb[0].mxu0
      %v471 = vadd.f32 %v330, %v470
      %v472 = vpop.f32.mrb[0].mxu0
      %473 = vmatprep.mubr.bf16.mxu0 0
      %474 = vmatmul.mubr.bf16.gmra.mrb[0].mxu0 %v398
      %v475 = vpop.f32.mrb[0].mxu0
      %v476 = vadd.f32 %v330, %v475
      %v477 = vpop.f32.mrb[0].mxu0
      %v478 = vpop.f32.mrb[0].mxu0
      %v479 = vadd.f32 %v330, %v478
      %v480 = vpop.f32.mrb[0].mxu0
      %481 = vmatprep.mubr.bf16.mxu0 0
      %482 = vmatmul.mubr.bf16.gmra.mrb[0].mxu0 %v401
      %v483 = vpop.f32.mrb[0].mxu0
      %v484 = vadd.f32 %v330, %v483
      %v485 = vpop.f32.mrb[0].mxu0
      %v486 = vpop.f32.mrb[0].mxu0
      %v487 = vadd.f32 %v330, %v486
      %v488 = vpop.f32.mrb[0].mxu0
      %489 = vmatprep.mubr.bf16.mxu0 0
      %490 = vmatmul.mubr.bf16.gmra.mrb[0].mxu0 %v404
      %v491 = vpop.f32.mrb[0].mxu0
      %v492 = vadd.f32 %v330, %v491
      %v493 = vpop.f32.mrb[0].mxu0
      %v494 = vpop.f32.mrb[0].mxu0
      %v495 = vadd.f32 %v330, %v494
      %v496 = vpop.f32.mrb[0].mxu0
      %497 = vmatprep.mubr.bf16.mxu0 0
      %498 = vmatmul.mubr.bf16.gmra.mrb[0].mxu0 %v407
      %v499 = vpop.f32.mrb[0].mxu0
      %v500 = vadd.f32 %v330, %v499
      %v501 = vpop.f32.mrb[0].mxu0
      %v502 = vpop.f32.mrb[0].mxu0
      %v503 = vadd.f32 %v330, %v502
      %v504 = vpop.f32.mrb[0].mxu0
      %505 = vdwg.mxu0
      %v506 = vmax.f32 %v444, 0.0
      %v507 = vmax.f32 %v447, 0.0
      %v508 = vmax.f32 %v452, 0.0
      %v509 = vmax.f32 %v455, 0.0
      %v510 = vmax.f32 %v460, 0.0
      %v511 = vmax.f32 %v463, 0.0
      %v512 = vmax.f32 %v468, 0.0
      %v513 = vmax.f32 %v471, 0.0
      %v514 = vmax.f32 %v476, 0.0
      %v515 = vmax.f32 %v479, 0.0
      %v516 = vmax.f32 %v484, 0.0
      %v517 = vmax.f32 %v487, 0.0
      %v518 = vmax.f32 %v492, 0.0
      %v519 = vmax.f32 %v495, 0.0
      %v520 = vmax.f32 %v500, 0.0
      %v521 = vmax.f32 %v503, 0.0
      %v522 = vpack.c.bf16 %v507, %v506
      %v523 = vpack.c.bf16 %v509, %v508
      %v524 = vpack.c.bf16 %v511, %v510
      %v525 = vpack.c.bf16 %v513, %v512
      %v526 = vpack.c.bf16 %v515, %v514
      %v527 = vpack.c.bf16 %v517, %v516
      %v528 = vpack.c.bf16 %v519, %v518
      %v529 = vpack.c.bf16 %v521, %v520
      %v530 = vld [vmem:[%s4] sm:$0xf]
      %v531 = vld [vmem:[%s4 + $0x4] sm:$0xf]
      %v532 = vld [vmem:[%s4 + $0x8] sm:$0xf]
      %v533 = vld [vmem:[%s4 + $0xc] sm:$0xf]
      %v534 = vld [vmem:[%s5] sm:$0x1]
      %v536 = vlaneseq
      %v537 = vshrl.u32 %v536, 7
      %v538 = vsub.s32 0, %v537
      %v539 = vrot.slane %v534, %v538
      %v545 = vunpack.c.l.b16 %v530
      %v546 = vunpack.c.l.b16 %v531
      %v547 = vunpack.c.l.b16 %v532
      %v548 = vunpack.c.l.b16 %v533
      %v549 = vpack.c.b16 %v546, %v545
      %v550 = vpack.c.b16 %v548, %v547
      %v554 = vsel %vm384, %v522, 0
      %v557 = vsel %vm384, %v523, 0
      %v560 = vsel %vm384, %v524, 0
      %v563 = vsel %vm384, %v525, 0
      %v566 = vsel %vm384, %v526, 0
      %v569 = vsel %vm384, %v527, 0
      %v572 = vsel %vm384, %v528, 0
      %v575 = vsel %vm384, %v529, 0
      %577 = vmatprep.subr.bf16.mxu0 0
      %578 = vmatpush1.bf16.msra.mxu0 %v549
      %579 = vmatprep.subr.bf16.mxu0 0
      %580 = vmatpush1.bf16.msra.mxu0 %v550
      %581 = vmatprep.subr.bf16.mxu0 0
      %582 = vmatpush1.bf16.msra.mxu0 0
      %583 = vmatprep.subr.bf16.mxu0 0
      %584 = vmatpush1.bf16.msra.mxu0 0
      %585 = vmatprep.subr.bf16.mxu0 0
      %586 = vmatpush1.bf16.msra.mxu0 0
      %587 = vmatprep.subr.bf16.mxu0 0
      %588 = vmatpush1.bf16.msra.mxu0 0
      %589 = vmatprep.subr.bf16.mxu0 0
      %590 = vmatpush1.bf16.msra.mxu0 0
      %591 = vmatprep.subr.bf16.mxu0 0
      %592 = vmatpush1.bf16.msra.mxu0 0
      %593 = vmatprep.subr.bf16.mxu0 0
      %594 = vmatpush1.bf16.msra.mxu0 0
      %595 = vmatprep.subr.bf16.mxu0 0
      %596 = vmatpush1.bf16.msra.mxu0 0
      %597 = vmatprep.subr.bf16.mxu0 0
      %598 = vmatpush1.bf16.msra.mxu0 0
      %599 = vmatprep.subr.bf16.mxu0 0
      %600 = vmatpush1.bf16.msra.mxu0 0
      %601 = vmatprep.subr.bf16.mxu0 0
      %602 = vmatpush1.bf16.msra.mxu0 0
      %603 = vmatprep.subr.bf16.mxu0 0
      %604 = vmatpush1.bf16.msra.mxu0 0
      %605 = vmatprep.subr.bf16.mxu0 0
      %606 = vmatpush1.bf16.msra.mxu0 0
      %607 = vmatprep.subr.bf16.mxu0 0
      %608 = vmatpush1.bf16.msra.mxu0 0
      %609 = vmatprep.mubr.bf16.mxu0 0
      %610 = vmatmul.mubr.bf16.gmra.mrb[0].mxu0 %v554
      %v611 = vpop.f32.mrb[0].mxu0
      %v612 = vadd.f32 %v539, %v611
      %v613 = vpop.f32.mrb[0].mxu0
      %v614 = vpop.f32.mrb[0].mxu0
      %v615 = vadd.f32 %v539, %v614
      %v616 = vpop.f32.mrb[0].mxu0
      %617 = vmatprep.mubr.bf16.mxu0 0
      %618 = vmatmul.mubr.bf16.gmra.mrb[0].mxu0 %v557
      %v619 = vpop.f32.mrb[0].mxu0
      %v620 = vadd.f32 %v539, %v619
      %v621 = vpop.f32.mrb[0].mxu0
      %v622 = vpop.f32.mrb[0].mxu0
      %v623 = vadd.f32 %v539, %v622
      %v624 = vpop.f32.mrb[0].mxu0
      %625 = vmatprep.mubr.bf16.mxu0 0
      %626 = vmatmul.mubr.bf16.gmra.mrb[0].mxu0 %v560
      %v627 = vpop.f32.mrb[0].mxu0
      %v628 = vadd.f32 %v539, %v627
      %v629 = vpop.f32.mrb[0].mxu0
      %v630 = vpop.f32.mrb[0].mxu0
      %v631 = vadd.f32 %v539, %v630
      %v632 = vpop.f32.mrb[0].mxu0
      %633 = vmatprep.mubr.bf16.mxu0 0
      %634 = vmatmul.mubr.bf16.gmra.mrb[0].mxu0 %v563
      %v635 = vpop.f32.mrb[0].mxu0
      %v636 = vadd.f32 %v539, %v635
      %v637 = vpop.f32.mrb[0].mxu0
      %v638 = vpop.f32.mrb[0].mxu0
      %v639 = vadd.f32 %v539, %v638
      %v640 = vpop.f32.mrb[0].mxu0
      %641 = vmatprep.mubr.bf16.mxu0 0
      %642 = vmatmul.mubr.bf16.gmra.mrb[0].mxu0 %v566
      %v643 = vpop.f32.mrb[0].mxu0
      %v644 = vadd.f32 %v539, %v643
      %v645 = vpop.f32.mrb[0].mxu0
      %v646 = vpop.f32.mrb[0].mxu0
      %v647 = vadd.f32 %v539, %v646
      %v648 = vpop.f32.mrb[0].mxu0
      %649 = vmatprep.mubr.bf16.mxu0 0
      %650 = vmatmul.mubr.bf16.gmra.mrb[0].mxu0 %v569
      %v651 = vpop.f32.mrb[0].mxu0
      %v652 = vadd.f32 %v539, %v651
      %v653 = vpop.f32.mrb[0].mxu0
      %v654 = vpop.f32.mrb[0].mxu0
      %v655 = vadd.f32 %v539, %v654
      %v656 = vpop.f32.mrb[0].mxu0
      %657 = vmatprep.mubr.bf16.mxu0 0
      %658 = vmatmul.mubr.bf16.gmra.mrb[0].mxu0 %v572
      %v659 = vpop.f32.mrb[0].mxu0
      %v660 = vadd.f32 %v539, %v659
      %v661 = vpop.f32.mrb[0].mxu0
      %v662 = vpop.f32.mrb[0].mxu0
      %v663 = vadd.f32 %v539, %v662
      %v664 = vpop.f32.mrb[0].mxu0
      %665 = vmatprep.mubr.bf16.mxu0 0
      %666 = vmatmul.mubr.bf16.gmra.mrb[0].mxu0 %v575
      %v667 = vpop.f32.mrb[0].mxu0
      %v668 = vadd.f32 %v539, %v667
      %v669 = vpop.f32.mrb[0].mxu0
      %v670 = vpop.f32.mrb[0].mxu0
      %v671 = vadd.f32 %v539, %v670
      %v672 = vpop.f32.mrb[0].mxu0
      %673 = vdwg.mxu0
      %v674 = vmax.f32 %v612, 0.0
      %v675 = vmax.f32 %v615, 0.0
      %v676 = vmax.f32 %v620, 0.0
      %v677 = vmax.f32 %v623, 0.0
      %v678 = vmax.f32 %v628, 0.0
      %v679 = vmax.f32 %v631, 0.0
      %v680 = vmax.f32 %v636, 0.0
      %v681 = vmax.f32 %v639, 0.0
      %v682 = vmax.f32 %v644, 0.0
      %v683 = vmax.f32 %v647, 0.0
      %v684 = vmax.f32 %v652, 0.0
      %v685 = vmax.f32 %v655, 0.0
      %v686 = vmax.f32 %v660, 0.0
      %v687 = vmax.f32 %v663, 0.0
      %v688 = vmax.f32 %v668, 0.0
      %v689 = vmax.f32 %v671, 0.0
      %v690 = vld [vmem:[%s6] sm:$0x1]
      %v692 = vlaneseq
      %v693 = vshrl.u32 %v692, 7
      %v694 = vsub.s32 0, %v693
      %v695 = vrot.slane %v690, %v694
      %v697 = vmul.f32 %v674, %v695
      %v698 = vmul.f32 %v675, %v695
      %v699 = vmul.f32 %v676, %v695
      %v700 = vmul.f32 %v677, %v695
      %v701 = vmul.f32 %v678, %v695
      %v702 = vmul.f32 %v679, %v695
      %v703 = vmul.f32 %v680, %v695
      %v704 = vmul.f32 %v681, %v695
      %v705 = vmul.f32 %v682, %v695
      %v706 = vmul.f32 %v683, %v695
      %v707 = vmul.f32 %v684, %v695
      %v708 = vmul.f32 %v685, %v695
      %v709 = vmul.f32 %v686, %v695
      %v710 = vmul.f32 %v687, %v695
      %v711 = vmul.f32 %v688, %v695
      %v712 = vmul.f32 %v689, %v695
      %vm713 = vcmask 130048
      %v714 = vsel %vm713, %v697, 0.0
      %715 = vadd.xlane.f32.xlu0 %v714
      %v716 = vpop.xlane.xlu0 %715
      %v717 = vsel %vm713, %v698, 0.0
      %718 = vadd.xlane.f32.xlu0 %v717
      %v719 = vpop.xlane.xlu0 %718
      %v720 = vsel %vm713, %v699, 0.0
      %721 = vadd.xlane.f32.xlu0 %v720
      %v722 = vpop.xlane.xlu0 %721
      %v723 = vsel %vm713, %v700, 0.0
      %724 = vadd.xlane.f32.xlu0 %v723
      %v725 = vpop.xlane.xlu0 %724
      %v726 = vsel %vm713, %v701, 0.0
      %727 = vadd.xlane.f32.xlu0 %v726
      %v728 = vpop.xlane.xlu0 %727
      %v729 = vsel %vm713, %v702, 0.0
      %730 = vadd.xlane.f32.xlu0 %v729
      %v731 = vpop.xlane.xlu0 %730
      %v732 = vsel %vm713, %v703, 0.0
      %733 = vadd.xlane.f32.xlu0 %v732
      %v734 = vpop.xlane.xlu0 %733
      %v735 = vsel %vm713, %v704, 0.0
      %736 = vadd.xlane.f32.xlu0 %v735
      %v737 = vpop.xlane.xlu0 %736
      %v738 = vsel %vm713, %v705, 0.0
      %739 = vadd.xlane.f32.xlu0 %v738
      %v740 = vpop.xlane.xlu0 %739
      %v741 = vsel %vm713, %v706, 0.0
      %742 = vadd.xlane.f32.xlu0 %v741
      %v743 = vpop.xlane.xlu0 %742
      %v744 = vsel %vm713, %v707, 0.0
      %745 = vadd.xlane.f32.xlu0 %v744
      %v746 = vpop.xlane.xlu0 %745
      %v747 = vsel %vm713, %v708, 0.0
      %748 = vadd.xlane.f32.xlu0 %v747
      %v749 = vpop.xlane.xlu0 %748
      %v750 = vsel %vm713, %v709, 0.0
      %751 = vadd.xlane.f32.xlu0 %v750
      %v752 = vpop.xlane.xlu0 %751
      %v753 = vsel %vm713, %v710, 0.0
      %754 = vadd.xlane.f32.xlu0 %v753
      %v755 = vpop.xlane.xlu0 %754
      %v756 = vsel %vm713, %v711, 0.0
      %757 = vadd.xlane.f32.xlu0 %v756
      %v758 = vpop.xlane.xlu0 %757
      %v759 = vsel %vm713, %v712, 0.0
      %760 = vadd.xlane.f32.xlu0 %v759
      %v761 = vpop.xlane.xlu0 %760
      %v762 = vld [vmem:[%s296] sm:$0xff]
      %v763 = vld [vmem:[%s296 + $0x8] sm:$0xff]
      %v764 = vld [vmem:[%s296 + $0x10] sm:$0xff]
      %v765 = vld [vmem:[%s296 + $0x18] sm:$0xff]
      %v766 = vld [vmem:[%s296 + $0x20] sm:$0xff]
      %v767 = vld [vmem:[%s296 + $0x28] sm:$0xff]
      %v768 = vld [vmem:[%s296 + $0x30] sm:$0xff]
      %v769 = vld [vmem:[%s296 + $0x38] sm:$0xff]
      %v770 = vld [vmem:[%s296 + $0x40] sm:$0xff]
      %v771 = vld [vmem:[%s296 + $0x48] sm:$0xff]
      %v772 = vld [vmem:[%s296 + $0x50] sm:$0xff]
      %v773 = vld [vmem:[%s296 + $0x58] sm:$0xff]
      %v774 = vld [vmem:[%s296 + $0x60] sm:$0xff]
      %v775 = vld [vmem:[%s296 + $0x68] sm:$0xff]
      %v776 = vld [vmem:[%s296 + $0x70] sm:$0xff]
      %v777 = vld [vmem:[%s296 + $0x78] sm:$0xff]
      %v778 = vadd.f32 %v762, %v716
      %v779 = vadd.f32 %v763, %v719
      %v780 = vadd.f32 %v764, %v722
      %v781 = vadd.f32 %v765, %v725
      %v782 = vadd.f32 %v766, %v728
      %v783 = vadd.f32 %v767, %v731
      %v784 = vadd.f32 %v768, %v734
      %v785 = vadd.f32 %v769, %v737
      %v786 = vadd.f32 %v770, %v740
      %v787 = vadd.f32 %v771, %v743
      %v788 = vadd.f32 %v772, %v746
      %v789 = vadd.f32 %v773, %v749
      %v790 = vadd.f32 %v774, %v752
      %v791 = vadd.f32 %v775, %v755
      %v792 = vadd.f32 %v776, %v758
      %v793 = vadd.f32 %v777, %v761
      %v794 = vxor.u32 %v778, 2147483648
      %v795 = vxor.u32 %v779, 2147483648
      %v796 = vxor.u32 %v780, 2147483648
      %v797 = vxor.u32 %v781, 2147483648
      %v798 = vxor.u32 %v782, 2147483648
      %v799 = vxor.u32 %v783, 2147483648
      %v800 = vxor.u32 %v784, 2147483648
      %v801 = vxor.u32 %v785, 2147483648
      %v802 = vxor.u32 %v786, 2147483648
      %v803 = vxor.u32 %v787, 2147483648
      %v804 = vxor.u32 %v788, 2147483648
      %v805 = vxor.u32 %v789, 2147483648
      %v806 = vxor.u32 %v790, 2147483648
      %v807 = vxor.u32 %v791, 2147483648
      %v808 = vxor.u32 %v792, 2147483648
      %v809 = vxor.u32 %v793, 2147483648
      %v810 = vmul.f32 %v794, 1.442695
      %v811 = vpow.pop %v810
      %v812 = vmul.f32 %v795, 1.442695
      %v813 = vpow.pop %v812
      %v814 = vmul.f32 %v796, 1.442695
      %v815 = vpow.pop %v814
      %v816 = vmul.f32 %v797, 1.442695
      %v817 = vpow.pop %v816
      %v818 = vmul.f32 %v798, 1.442695
      %v819 = vpow.pop %v818
      %v820 = vmul.f32 %v799, 1.442695
      %v821 = vpow.pop %v820
      %v822 = vmul.f32 %v800, 1.442695
      %v823 = vpow.pop %v822
      %v824 = vmul.f32 %v801, 1.442695
      %v825 = vpow.pop %v824
      %v826 = vmul.f32 %v802, 1.442695
      %v827 = vpow.pop %v826
      %v828 = vmul.f32 %v803, 1.442695
      %v829 = vpow.pop %v828
      %v830 = vmul.f32 %v804, 1.442695
      %v831 = vpow.pop %v830
      %v832 = vmul.f32 %v805, 1.442695
      %v833 = vpow.pop %v832
      %v834 = vmul.f32 %v806, 1.442695
      %v835 = vpow.pop %v834
      %v836 = vmul.f32 %v807, 1.442695
      %v837 = vpow.pop %v836
      %v838 = vmul.f32 %v808, 1.442695
      %v839 = vpow.pop %v838
      %v840 = vmul.f32 %v809, 1.442695
      %v841 = vpow.pop %v840
      %v842 = vadd.f32 %v811, 1.0
      %v843 = vadd.f32 %v813, 1.0
      %v844 = vadd.f32 %v815, 1.0
      %v845 = vadd.f32 %v817, 1.0
      %v846 = vadd.f32 %v819, 1.0
      %v847 = vadd.f32 %v821, 1.0
      %v848 = vadd.f32 %v823, 1.0
      %v849 = vadd.f32 %v825, 1.0
      %v850 = vadd.f32 %v827, 1.0
      %v851 = vadd.f32 %v829, 1.0
      %v852 = vadd.f32 %v831, 1.0
      %v853 = vadd.f32 %v833, 1.0
      %v854 = vadd.f32 %v835, 1.0
      %v855 = vadd.f32 %v837, 1.0
      %v856 = vadd.f32 %v839, 1.0
      %v857 = vadd.f32 %v841, 1.0
      %v858 = vrcp.pop %v842
      %v859 = vmul.f32 1.0, %v858
      %v860 = vrcp.pop %v843
      %v861 = vmul.f32 1.0, %v860
      %v862 = vrcp.pop %v844
      %v863 = vmul.f32 1.0, %v862
      %v864 = vrcp.pop %v845
      %v865 = vmul.f32 1.0, %v864
      %v866 = vrcp.pop %v846
      %v867 = vmul.f32 1.0, %v866
      %v868 = vrcp.pop %v847
      %v869 = vmul.f32 1.0, %v868
      %v870 = vrcp.pop %v848
      %v871 = vmul.f32 1.0, %v870
      %v872 = vrcp.pop %v849
      %v873 = vmul.f32 1.0, %v872
      %v874 = vrcp.pop %v850
      %v875 = vmul.f32 1.0, %v874
      %v876 = vrcp.pop %v851
      %v877 = vmul.f32 1.0, %v876
      %v878 = vrcp.pop %v852
      %v879 = vmul.f32 1.0, %v878
      %v880 = vrcp.pop %v853
      %v881 = vmul.f32 1.0, %v880
      %v882 = vrcp.pop %v854
      %v883 = vmul.f32 1.0, %v882
      %v884 = vrcp.pop %v855
      %v885 = vmul.f32 1.0, %v884
      %v886 = vrcp.pop %v856
      %v887 = vmul.f32 1.0, %v886
      %v888 = vrcp.pop %v857
      %v889 = vmul.f32 1.0, %v888
      %vm890 = vcmask 7168
      %891 = vst.msk [vmem:[%s302] sm:$0xff] %vm890, %v859
      %892 = vst.msk [vmem:[%s302 + $0x8] sm:$0xff] %vm890, %v861
      %893 = vst.msk [vmem:[%s302 + $0x10] sm:$0xff] %vm890, %v863
      %894 = vst.msk [vmem:[%s302 + $0x18] sm:$0xff] %vm890, %v865
      %895 = vst.msk [vmem:[%s302 + $0x20] sm:$0xff] %vm890, %v867
      %896 = vst.msk [vmem:[%s302 + $0x28] sm:$0xff] %vm890, %v869
      %897 = vst.msk [vmem:[%s302 + $0x30] sm:$0xff] %vm890, %v871
      %898 = vst.msk [vmem:[%s302 + $0x38] sm:$0xff] %vm890, %v873
      %899 = vst.msk [vmem:[%s302 + $0x40] sm:$0xff] %vm890, %v875
      %900 = vst.msk [vmem:[%s302 + $0x48] sm:$0xff] %vm890, %v877
      %901 = vst.msk [vmem:[%s302 + $0x50] sm:$0xff] %vm890, %v879
      %902 = vst.msk [vmem:[%s302 + $0x58] sm:$0xff] %vm890, %v881
      %903 = vst.msk [vmem:[%s302 + $0x60] sm:$0xff] %vm890, %v883
      %904 = vst.msk [vmem:[%s302 + $0x68] sm:$0xff] %vm890, %v885
      %905 = vst.msk [vmem:[%s302 + $0x70] sm:$0xff] %vm890, %v887
      %906 = vst.msk [vmem:[%s302 + $0x78] sm:$0xff] %vm890, %v889
      %s907 = smul.u32 16, %s18
      %p908 = scmp.lt.s32.totalorder %s907, 47
      %s909 = scalar_select %p908, %s907, 47
      %s910 = smul.addr %s909, 8
      %s911 = scalar_lea.vmem %s7, %s910
      // Predicated region
      $region49: #{tpu_custom_call.1} parent=47 // pred_check
        %p912 = pneg %p193
      $region50: #{tpu_custom_call.1} parent=47 // pred_check_branch
        %914 = sbr.rel (%p912) target = $region52
      $region51: #{tpu_custom_call.1} parent=47 // pred_region
        %s915 = smul.u32 16, %s18
      $region52: #{tpu_custom_call.1} parent=47 // pred_fallthru
        _
    $region48: #{tpu_custom_call.1} parent=5 // pred_fallthru
      _
    %p916 = scmp.le.s32.totalorder 2, %s13
    // Predicated region
    $region53: #{tpu_custom_call.1} parent=5 // pred_check
      %p917 = pneg %p916
    $region54: #{tpu_custom_call.1} parent=5 // pred_check_branch
      %919 = sbr.rel (%p917) target = $region56
    $region55: #{tpu_custom_call.1} parent=5 // pred_region
      %s920 = ssub.s32 %s13, 2
      // Predicated region
      $region57: #{tpu_custom_call.1} parent=55 // pred_check
        %p921 = pneg %p199
      $region58: #{tpu_custom_call.1} parent=55 // pred_check_branch
        %923 = sbr.rel (%p921) target = $region60
      $region59: #{tpu_custom_call.1} parent=55 // pred_region
        %s924 = smul.u32 16, %s19
        %p925 = scmp.lt.s32.totalorder %s924, 47
        %s926 = scalar_select %p925, %s924, 47
        %s927 = smul.addr %s926, 8
        %s928 = scalar_lea.vmem %s7, %s927
      $region60: #{tpu_custom_call.1} parent=55 // pred_fallthru
        _
    $region56: #{tpu_custom_call.1} parent=5 // pred_fallthru
      _
  $region6: #{tpu_custom_call.1} parent=0 // loop_footer
    %s17 = sadd.s32 1, %s13
  $region7: #{tpu_custom_call.1} parent=0 // loop_footer_branch
    %12 = sbr.rel target = $region3
  $region8: #{tpu_custom_call.1} parent=0 // loop_exit
    _

</llo_original>
